<compile_context>
chip_gen: v5e
topology: v5e:2x2
jax: 0.10.0
libtpu: 0.0.40
codegen_flags: <defaults>
</compile_context>

<pallas_src>
import numpy as np
import jax
import jax.numpy as jnp
from jax.experimental import pallas as pl
from jax.experimental.pallas import tpu as pltpu


_SEG_BYTES_BUDGET = 2 * 1024 * 1024   # max size of the resident segment matrix


# ---------------------------------------------------------------------------
# Shared in-kernel math
# ---------------------------------------------------------------------------
def _weighted_sq_error_sum(errors_sq, dm1, inv_norm):
    """sum_{b,s} errors_sq[b,s] * w[b,s] with the closed-form adaptive weight.

    Matches the torch module exactly:
        step_coeff = ones + (d-1)*I,  w1 = softmax(-z)
        w1*w2      = 1/d + ((d-1)/d) * w1
        w_norm     = (1 + (d-1)*w1) / (S + d - 1)
    dm1 = d - 1 and inv_norm = 1/(S + d - 1) are precomputed on the host.
    """
    errors = jnp.sqrt(errors_sq)                                   # (tb, S)
    S = errors.shape[-1]
    mean = jnp.mean(errors, axis=-1, keepdims=True)                # (tb, 1)
    # torch.std defaults to the unbiased (n-1) estimator.
    var = jnp.sum((errors - mean) ** 2, axis=-1, keepdims=True) / max(S - 1, 1)
    std = jnp.sqrt(var) + 1e-6                                     # (tb, 1)
    neg_z = (mean - errors) / std                                  # exact div (tiny)
    m = jnp.max(neg_z, axis=-1, keepdims=True)
    e = jnp.exp(neg_z - m)
    w1 = e / jnp.sum(e, axis=-1, keepdims=True)                    # exact softmax
    w = (1.0 + dm1 * w1) * inv_norm                                # (tb, S)
    return jnp.sum(errors_sq * w)


# ---------------------------------------------------------------------------
# Kernels
# ---------------------------------------------------------------------------
def _ada_loss_packed_kernel(c_ref, x_ref, tgt_ref, seg_ref, out_ref):
    # c_ref:   (1, 2)      SMEM scalars: [d - 1, 1/(S + d - 1)]
    # x_ref:   (tb, S*D)   lane-dense prediction tile (native dtype)
    # tgt_ref: (tb, S*D)   lane-dense target tile
    # seg_ref: (S*D, S)    f32 block-diagonal ones; VMEM-resident (index 0,0)
    # out_ref: (1, 1)      SMEM per-tile partial sum
    dm1 = c_ref[0, 0]
    inv_norm = c_ref[0, 1]
    # Single expression: only one O(tile) f32 temporary bound at a time.
    diff = x_ref[...].astype(jnp.float32) - tgt_ref[...].astype(jnp.float32)
    diff_sq = diff * diff                                          # (tb, S*D)
    # Segmented per-(b, s) reduction on the otherwise-idle MXU.
    errors_sq = jnp.dot(diff_sq, seg_ref[...],
                        preferred_element_type=jnp.float32)        # (tb, S)
    out_ref[0, 0] = _weighted_sq_error_sum(errors_sq, dm1, inv_norm)


def _ada_loss_kernel_3d(c_ref, x_ref, tgt_ref, out_ref):
    # Fallback path when D >= 128 (lanes already full) or the segment matrix
    # would not fit the resident-VMEM budget.
    dm1 = c_ref[0, 0]
    inv_norm = c_ref[0, 1]
    diff = x_ref[...].astype(jnp.float32) - tgt_ref[...].astype(jnp.float32)
    errors_sq = jnp.sum(diff * diff, axis=-1)                      # (tb, S)
    out_ref[0, 0] = _weighted_sq_error_sum(errors_sq, dm1, inv_norm)


# ---------------------------------------------------------------------------
# Host-side helpers
# ---------------------------------------------------------------------------
def _tpu_budgets():
    """(slab_budget_bytes_per_input_tile, vmem_limit_bytes) per TPU generation."""
    phys = 64 * 1024 * 1024            # conservative default (v7x per-TC VMEM)
    try:
        info = pltpu.get_tpu_info()
        phys = int(getattr(info, "vmem_capacity_bytes", phys)) or phys
    except Exception:
        pass
    if phys >= 100 * 1024 * 1024:      # v5e / v6e: 128 MiB VMEM
        return 8 * 1024 * 1024, 96 * 1024 * 1024
    return 4 * 1024 * 1024, 44 * 1024 * 1024   # v7x: 64 MiB per TensorCore


def _pick_tb(B, cap, aligned):
    """Largest batch tile dividing B that fits the VMEM cap.

    Prefers >= 2 tiles (tb <= B//2) so the 'parallel' grid axis shards across
    v7x's two TensorCores.  For the lane-packed 2-D layout (`aligned=True`)
    the sublane dim must be a multiple of 8 or the full batch.  Returns None
    if no compatible tile exists.
    """
    def ok(tb):
        return B % tb == 0 and ((not aligned) or tb % 8 == 0 or tb == B)

    for upper in (min(cap, B // 2), min(cap, B)):
        for tb in range(upper, 0, -1):
            if ok(tb):
                return tb
    return None


def ada_weighted_loss(input_, target, global_step, strategy="linear",
                      block_b=None, lane_pack=None):
    B, S, D = target.shape
    g = float(global_step)
    if strategy == "log":
        d = float(np.log(g + np.e - 1))
    elif strategy == "linear":
        d = g
    elif strategy == "nlog":
        d = float(g * np.log(g + np.e - 1))
    elif strategy == "quadratic":
        d = g ** 2
    else:
        raise KeyError(
            "Decay function must be one of ['log','linear','nlog','quadratic']")

    slab_budget, vmem_limit = _tpu_budgets()
    itemsize = max(jnp.dtype(input_.dtype).itemsize,
                   jnp.dtype(target.dtype).itemsize)
    cap = max(1, slab_budget // (S * D * itemsize))

    # Lane-pack the feature axis when D under-fills the 128-lane vregs and the
    # (S*D, S) segment matrix is small enough to stay resident in VMEM.
    use_packed = lane_pack if lane_pack is not None else (
        D < 128 and (S * D) * S * 4 <= _SEG_BYTES_BUDGET)

    tb = None
    if use_packed:
        if block_b is not None:
            tb = int(block_b)
            if B % tb != 0 or not (tb % 8 == 0 or tb == B):
                tb = None                      # incompatible with 2-D layout
        else:
            tb = _pick_tb(B, cap, aligned=True)
        if tb is None:
            use_packed = False                 # fall back to the 3-D layout

    if not use_packed:
        tb = int(block_b) if block_b is not None else _pick_tb(B, cap, aligned=False)

    assert tb is not None and B % tb == 0, "batch tile must divide the batch size"
    num_tiles = B // tb

    # Hoisted scalar math: d-1 and 1/(S+d-1) (normalisation becomes a multiply).
    coeffs = jnp.array([[d - 1.0, 1.0 / (S + d - 1.0)]], dtype=jnp.float32)

    compiler_params = pltpu.CompilerParams(
        dimension_semantics=("parallel",),
        vmem_limit_bytes=vmem_limit,
    )
    smem = pltpu.MemorySpace.SMEM

    if use_packed:
        x2d = input_.reshape(B, S * D)         # contiguous view: free
        t2d = target.reshape(B, S * D)
        # Block-diagonal ones: seg[j, s] = 1 iff j // D == s.
        seg = jnp.asarray(
            (np.arange(S * D)[:, None] // D == np.arange(S)[None, :]),
            dtype=jnp.float32)
        partials = pl.pallas_call(
            _ada_loss_packed_kernel,
            out_shape=jax.ShapeDtypeStruct((num_tiles, 1), jnp.float32),
            grid=(num_tiles,),
            in_specs=[
                pl.BlockSpec((1, 2), lambda b: (0, 0), memory_space=smem),
                pl.BlockSpec((tb, S * D), lambda b: (b, 0)),
                pl.BlockSpec((tb, S * D), lambda b: (b, 0)),
                pl.BlockSpec((S * D, S), lambda b: (0, 0)),   # resident
            ],
            out_specs=pl.BlockSpec((1, 1), lambda b: (b, 0), memory_space=smem),
            compiler_params=compiler_params,
        )(coeffs, x2d, t2d, seg)
    else:
        partials = pl.pallas_call(
            _ada_loss_kernel_3d,
            out_shape=jax.ShapeDtypeStruct((num_tiles, 1), jnp.float32),
            grid=(num_tiles,),
            in_specs=[
                pl.BlockSpec((1, 2), lambda b: (0, 0), memory_space=smem),
                pl.BlockSpec((tb, S, D), lambda b: (b, 0, 0)),
                pl.BlockSpec((tb, S, D), lambda b: (b, 0, 0)),
            ],
            out_specs=pl.BlockSpec((1, 1), lambda b: (b, 0), memory_space=smem),
            compiler_params=compiler_params,
        )(coeffs, input_, target)

    return jnp.sum(partials) / (B * D)


# ---------------------------------------------------------------------------
# Pure-JAX reference (line-by-line port of the torch forward, 'linear' only)
# ---------------------------------------------------------------------------
def _reference_loss(inp, tgt, global_step, strategy="linear"):
    bsz, seq, x_dim = tgt.shape
    errors = jnp.sqrt(jnp.sum((inp - tgt) ** 2, axis=-1))
    mean = jnp.mean(errors, axis=-1, keepdims=True)
    std = jnp.std(errors, axis=-1, ddof=1, keepdims=True) + 1e-6
    nz = -(errors - mean) / std
    w1 = jax.nn.softmax(nz, axis=-1)
    ez = jnp.exp(nz)
    ez_rep = jnp.tile(ez[:, None, :], (1, seq, 1))
    if strategy == "linear":
        d = float(global_step)
    else:
        raise KeyError("ref only covers 'linear'")
    sc = jnp.ones((seq, seq), jnp.float32).at[
        jnp.arange(seq), jnp.arange(seq)].set(d)
    ez_rep = ez_rep * sc
    w2 = jnp.sum(ez_rep, axis=-1) / ez_rep[:, jnp.arange(seq), jnp.arange(seq)]
    w = w1 * w2
    w = (w / jnp.sum(w, axis=-1, keepdims=True))[:, :, None]
    return jnp.sum((tgt - inp) ** 2 * w) / (bsz * x_dim)


if __name__ == "__main__":
    bsz, seq, x_dim = 2, 8, 32
    global_step = 10

    key = jax.random.PRNGKey(0)
    k1, k2 = jax.random.split(key)
    input_ = jax.random.normal(k1, (bsz, seq, x_dim), dtype=jnp.float32)
    target = jax.random.normal(k2, (bsz, seq, x_dim), dtype=jnp.float32)

    ref = _reference_loss(input_, target, global_step)

    # 1) Lane-packed main path (D=32 < 128), auto batch tile.
    loss = jax.block_until_ready(ada_weighted_loss(input_, target, global_step))
    np.testing.assert_allclose(float(loss), float(ref), rtol=2e-3, atol=1e-5)

    # 2) 3-D fallback path, multi-tile (exercises pipelining + partial sums).
    loss_3d = jax.block_until_ready(
        ada_weighted_loss(input_, target, global_step,
                          lane_pack=False, block_b=1))
    np.testing.assert_allclose(float(loss_3d), float(ref), rtol=2e-3, atol=1e-5)

    # 3) Lane-packed, 2 sublane-aligned tiles, bf16 ingestion (dtype-aware cap).
    bsz2 = 16
    k3, k4 = jax.random.split(jax.random.PRNGKey(1))
    inp2 = jax.random.normal(k3, (bsz2, seq, x_dim), jnp.float32).astype(jnp.bfloat16)
    tgt2 = jax.random.normal(k4, (bsz2, seq, x_dim), jnp.float32).astype(jnp.bfloat16)
    ref2 = _reference_loss(inp2.astype(jnp.float32), tgt2.astype(jnp.float32),
                           global_step)
    loss2 = jax.block_until_ready(
        ada_weighted_loss(inp2, tgt2, global_step, block_b=8))
    np.testing.assert_allclose(float(loss2), float(ref2), rtol=2e-3, atol=1e-5)

    print("KERNEL_OK")
</pallas_src>

<mosaic_0001>
module attributes {stable_mosaic.version = 11 : i64} {
  func.func @_ada_loss_packed_kernel(%arg0: i32, %arg1: memref<1x2xf32, #tpu.memory_space<smem>>, %arg2: memref<2x256xf32, #tpu.memory_space<vmem>>, %arg3: memref<2x256xf32, #tpu.memory_space<vmem>>, %arg4: memref<256x8xf32, #tpu.memory_space<vmem>>, %arg5: memref<1x1xf32, #tpu.memory_space<smem>>) attributes {dimension_semantics = [#tpu.dimension_semantics<parallel>], iteration_bounds = array<i64: 1>, scalar_prefetch = 0 : i64, scratch_operands = 0 : i64, tpu.core_type = #tpu.core_type<tc>, window_params = [{transform_indices = @transform_0, window_bounds = array<i64: 1, 2>}, {transform_indices = @transform_1, window_bounds = array<i64: 2, 256>}, {transform_indices = @transform_2, window_bounds = array<i64: 2, 256>}, {pipeline_mode = #tpu.pipeline_mode<synchronous>, transform_indices = @transform_3, window_bounds = array<i64: 256, 8>}, {transform_indices = @transform_4, window_bounds = array<i64: 1, 1>}]} {
    %c0 = arith.constant 0 : index
    %c0_0 = arith.constant 0 : index
    %0 = memref.load %arg1[%c0, %c0_0] : memref<1x2xf32, #tpu.memory_space<smem>>
    %c0_1 = arith.constant 0 : index
    %c1 = arith.constant 1 : index
    %1 = memref.load %arg1[%c0_1, %c1] : memref<1x2xf32, #tpu.memory_space<smem>>
    %c0_2 = arith.constant 0 : index
    %c0_3 = arith.constant 0 : index
    %2 = vector.load %arg2[%c0_2, %c0_3] : memref<2x256xf32, #tpu.memory_space<vmem>>, vector<2x256xf32>
    %c0_4 = arith.constant 0 : index
    %c0_5 = arith.constant 0 : index
    %3 = vector.load %arg3[%c0_4, %c0_5] : memref<2x256xf32, #tpu.memory_space<vmem>>, vector<2x256xf32>
    %4 = arith.subf %2, %3 : vector<2x256xf32>
    %5 = arith.mulf %4, %4 : vector<2x256xf32>
    %c0_6 = arith.constant 0 : index
    %c0_7 = arith.constant 0 : index
    %6 = vector.load %arg4[%c0_6, %c0_7] : memref<256x8xf32, #tpu.memory_space<vmem>>, vector<256x8xf32>
    %cst = arith.constant dense<0.000000e+00> : vector<2x8xf32>
    %7 = tpu.matmul %5, %6, %cst {dimension_numbers = #tpu.dot_dimension_numbers<[1], [0], [0], [1], [0, 0, 1, 1], [], []>} : vector<2x256xf32>, vector<256x8xf32>, vector<2x8xf32> -> vector<2x8xf32>
    %8 = math.sqrt %7 : vector<2x8xf32>
    %cst_8 = arith.constant dense<0.000000e+00> : vector<2xf32>
    %9 = vector.multi_reduction <add>, %8, %cst_8 [1] : vector<2x8xf32> to vector<2xf32>
    %10 = vector.shape_cast %9 : vector<2xf32> to vector<2x1xf32>
    %cst_9 = arith.constant 8.000000e+00 : f32
    %11 = vector.broadcast %cst_9 : f32 to vector<2x1xf32>
    %12 = arith.divf %10, %11 : vector<2x1xf32>
    %13 = vector.broadcast %12 : vector<2x1xf32> to vector<2x8xf32>
    %14 = arith.subf %8, %13 : vector<2x8xf32>
    %15 = arith.mulf %14, %14 : vector<2x8xf32>
    %cst_10 = arith.constant dense<0.000000e+00> : vector<2xf32>
    %16 = vector.multi_reduction <add>, %15, %cst_10 [1] : vector<2x8xf32> to vector<2xf32>
    %17 = vector.shape_cast %16 : vector<2xf32> to vector<2x1xf32>
    %cst_11 = arith.constant 7.000000e+00 : f32
    %18 = vector.broadcast %cst_11 : f32 to vector<2x1xf32>
    %19 = arith.divf %17, %18 : vector<2x1xf32>
    %20 = math.sqrt %19 : vector<2x1xf32>
    %cst_12 = arith.constant 9.99999997E-7 : f32
    %21 = vector.broadcast %cst_12 : f32 to vector<2x1xf32>
    %22 = arith.addf %20, %21 : vector<2x1xf32>
    %23 = vector.broadcast %12 : vector<2x1xf32> to vector<2x8xf32>
    %24 = arith.subf %23, %8 : vector<2x8xf32>
    %25 = vector.broadcast %22 : vector<2x1xf32> to vector<2x8xf32>
    %26 = arith.divf %24, %25 : vector<2x8xf32>
    %cst_13 = arith.constant dense<0xFF800000> : vector<2xf32>
    %27 = vector.multi_reduction <maximumf>, %26, %cst_13 [1] : vector<2x8xf32> to vector<2xf32>
    %28 = vector.shape_cast %27 : vector<2xf32> to vector<2x1xf32>
    %29 = vector.broadcast %28 : vector<2x1xf32> to vector<2x8xf32>
    %30 = arith.subf %26, %29 : vector<2x8xf32>
    %31 = math.exp %30 : vector<2x8xf32>
    %cst_14 = arith.constant dense<0.000000e+00> : vector<2xf32>
    %32 = vector.multi_reduction <add>, %31, %cst_14 [1] : vector<2x8xf32> to vector<2xf32>
    %33 = vector.shape_cast %32 : vector<2xf32> to vector<2x1xf32>
    %34 = vector.broadcast %33 : vector<2x1xf32> to vector<2x8xf32>
    %35 = arith.divf %31, %34 : vector<2x8xf32>
    %36 = vector.broadcast %0 : f32 to vector<2x8xf32>
    %37 = arith.mulf %36, %35 : vector<2x8xf32>
    %cst_15 = arith.constant 1.000000e+00 : f32
    %38 = vector.broadcast %cst_15 : f32 to vector<2x8xf32>
    %39 = arith.addf %38, %37 : vector<2x8xf32>
    %40 = vector.broadcast %1 : f32 to vector<2x8xf32>
    %41 = arith.mulf %39, %40 : vector<2x8xf32>
    %42 = arith.mulf %7, %41 : vector<2x8xf32>
    %43 = vector.shape_cast %42 : vector<2x8xf32> to vector<1x2x8xf32>
    %cst_16 = arith.constant dense<0.000000e+00> : vector<1xf32>
    %44 = vector.multi_reduction <add>, %43, %cst_16 [1, 2] : vector<1x2x8xf32> to vector<1xf32>
    %45 = vector.shape_cast %44 : vector<1xf32> to vector<1x1x1xf32>
    %46 = vector.extract %45[0, 0, 0] : f32 from vector<1x1x1xf32>
    %c0_17 = arith.constant 0 : index
    %c0_18 = arith.constant 0 : index
    %47 = memref.load %arg5[%c0_17, %c0_18] : memref<1x1xf32, #tpu.memory_space<smem>>
    memref.store %46, %arg5[%c0_17, %c0_18] : memref<1x1xf32, #tpu.memory_space<smem>>
    return
  }
  func.func @transform_0(%arg0: i32) -> (i32, i32) {
    %c0_i32 = arith.constant 0 : i32
    %c0_i32_0 = arith.constant 0 : i32
    %c0_i32_1 = arith.constant 0 : i32
    return %c0_i32, %c0_i32_0 : i32, i32
  }
  func.func @transform_1(%arg0: i32) -> (i32, i32) {
    %c0_i32 = arith.constant 0 : i32
    %c0_i32_0 = arith.constant 0 : i32
    return %arg0, %c0_i32 : i32, i32
  }
  func.func @transform_2(%arg0: i32) -> (i32, i32) {
    %c0_i32 = arith.constant 0 : i32
    %c0_i32_0 = arith.constant 0 : i32
    return %arg0, %c0_i32 : i32, i32
  }
  func.func @transform_3(%arg0: i32) -> (i32, i32) {
    %c0_i32 = arith.constant 0 : i32
    %c0_i32_0 = arith.constant 0 : i32
    %c0_i32_1 = arith.constant 0 : i32
    return %c0_i32, %c0_i32_0 : i32, i32
  }
  func.func @transform_4(%arg0: i32) -> (i32, i32) {
    %c0_i32 = arith.constant 0 : i32
    %c0_i32_0 = arith.constant 0 : i32
    return %arg0, %c0_i32 : i32, i32
  }
}

</mosaic_0001>

<llo_original>
// kernel: tpu_custom_call.1
$region0: #{tpu_custom_call.1}
  #allocation0 [shape = 'u32[]', space=smem, size = 0x4, offset = 0x4, fixed_abs, tag = 'smem constant byte address 0x4 - core index']
  #allocation1 [shape = 'u32[72,128]{1,0:T(1,128)}', space=vmem, size = 0x9000, scoped, tag = 'internal scratch']
  %s0 = inlined_call_operand.vmem [shape: f32[1,2], index: 0, kind: input, shape index: {}]
  %s1 = inlined_call_operand.vmem [shape: f32[2,256], index: 1, kind: input, shape index: {}]
  %s2 = inlined_call_operand.vmem [shape: f32[2,256], index: 2, kind: input, shape index: {}]
  %s3 = inlined_call_operand.vmem [shape: f32[256,8], index: 3, kind: input, shape index: {}]
  %s4 = inlined_call_operand.hbm [shape: f32[1,1], index: 4, kind: output, shape index: {}]
  %s5 = sld [smem:[#allocation0]]
  $region30: #{tpu_custom_call.1} parent=0
    _
  %s7 = ssub.s32 1, %s5
  %s8 = scalar_select 0, %s7, %s5
  $region1: #{tpu_custom_call.1} parent=0
    #allocation2 [shape = 'u8[512]{0}', space=smem, size = 0x200, scoped, tag = 'input window, operand 0, single buffered']
    #allocation3 [shape = 's32[1]{0}', space=sflag, size = 0x4, scoped, tag = 'scoped memory for tpu_custom_call.1']
    #allocation4 [shape = 's32[1]{0}', space=sflag, size = 0x4, scoped, tag = 'scoped memory for tpu_custom_call.1']
    #allocation5 [shape = 'u8[512]{0}', space=smem, size = 0x200, scoped, tag = 'output window, operand 0, single buffered']
    %9 = vsyncpa [#allocation4], 0
    %10 = vsyncpa [#allocation3], 0
    // Predicated region
    $region2: #{tpu_custom_call.1} parent=1 // pred_check
      _
    $region3: #{tpu_custom_call.1} parent=1 // pred_check_branch
      %12 = sbr.rel (0) target = $region5
    $region4: #{tpu_custom_call.1} parent=1 // pred_region
      %14 = vsyncadd [#allocation4], 0
      %s16 = sshll.u32 %s0, 4
      %s17 = int_to_ptr.vmem [resolvable:$true] %s16
      %19 = dma.vmem_to_smem %s17, 16, [#allocation2], [#allocation4]
    $region5: #{tpu_custom_call.1} parent=1 // pred_fallthru
      _
    // Predicated region
    $region6: #{tpu_custom_call.1} parent=1 // pred_check
      _
    $region7: #{tpu_custom_call.1} parent=1 // pred_check_branch
      %21 = sbr.rel (0) target = $region9
    $region8: #{tpu_custom_call.1} parent=1 // pred_region
      _
    $region9: #{tpu_custom_call.1} parent=1 // pred_fallthru
      _
    // Predicated region
    $region10: #{tpu_custom_call.1} parent=1 // pred_check
      _
    $region11: #{tpu_custom_call.1} parent=1 // pred_check_branch
      %23 = sbr.rel (0) target = $region13
    $region12: #{tpu_custom_call.1} parent=1 // pred_region
      _
    $region13: #{tpu_custom_call.1} parent=1 // pred_fallthru
      _
    // Predicated region
    $region14: #{tpu_custom_call.1} parent=1 // pred_check
      _
    $region15: #{tpu_custom_call.1} parent=1 // pred_check_branch
      %25 = sbr.rel (0) target = $region17
    $region16: #{tpu_custom_call.1} parent=1 // pred_region
      _
    $region17: #{tpu_custom_call.1} parent=1 // pred_fallthru
      _
    // Predicated region
    $region18: #{tpu_custom_call.1} parent=1 // pred_check
      _
    $region19: #{tpu_custom_call.1} parent=1 // pred_check_branch
      %27 = sbr.rel (0) target = $region21
    $region20: #{tpu_custom_call.1} parent=1 // pred_region
      %29 = dma.done [#allocation4], 16
    $region21: #{tpu_custom_call.1} parent=1 // pred_fallthru
      _
    %30 = sfence
    %s31 = sld [smem:[#allocation2]]
    %s32 = sld [smem:[#allocation2 + $0x1]]
    %v33 = vld [vmem:[%s1] sm:$0xf]
    %v34 = vld [vmem:[%s2] sm:$0xf]
    %v35 = vsub.f32 %v33, %v34
    %v36 = vmul.f32 %v35, %v35
    %v37 = vld [vmem:[%s3] sm:$0xff]
    %v38 = vld [vmem:[%s3 + $0x8] sm:$0xff]
    %v39 = vld [vmem:[%s3 + $0x10] sm:$0xff]
    %v40 = vld [vmem:[%s3 + $0x18] sm:$0xff]
    %v41 = vld [vmem:[%s3 + $0x20] sm:$0xff]
    %v42 = vld [vmem:[%s3 + $0x28] sm:$0xff]
    %v43 = vld [vmem:[%s3 + $0x30] sm:$0xff]
    %v44 = vld [vmem:[%s3 + $0x38] sm:$0xff]
    %v45 = vld [vmem:[%s3 + $0x40] sm:$0xff]
    %v46 = vld [vmem:[%s3 + $0x48] sm:$0xff]
    %v47 = vld [vmem:[%s3 + $0x50] sm:$0xff]
    %v48 = vld [vmem:[%s3 + $0x58] sm:$0xff]
    %v49 = vld [vmem:[%s3 + $0x60] sm:$0xff]
    %v50 = vld [vmem:[%s3 + $0x68] sm:$0xff]
    %v51 = vld [vmem:[%s3 + $0x70] sm:$0xff]
    %v52 = vld [vmem:[%s3 + $0x78] sm:$0xff]
    %v53 = vld [vmem:[%s3 + $0x80] sm:$0xff]
    %v54 = vld [vmem:[%s3 + $0x88] sm:$0xff]
    %v55 = vld [vmem:[%s3 + $0x90] sm:$0xff]
    %v56 = vld [vmem:[%s3 + $0x98] sm:$0xff]
    %v57 = vld [vmem:[%s3 + $0xa0] sm:$0xff]
    %v58 = vld [vmem:[%s3 + $0xa8] sm:$0xff]
    %v59 = vld [vmem:[%s3 + $0xb0] sm:$0xff]
    %v60 = vld [vmem:[%s3 + $0xb8] sm:$0xff]
    %v61 = vld [vmem:[%s3 + $0xc0] sm:$0xff]
    %v62 = vld [vmem:[%s3 + $0xc8] sm:$0xff]
    %v63 = vld [vmem:[%s3 + $0xd0] sm:$0xff]
    %v64 = vld [vmem:[%s3 + $0xd8] sm:$0xff]
    %v65 = vld [vmem:[%s3 + $0xe0] sm:$0xff]
    %v66 = vld [vmem:[%s3 + $0xe8] sm:$0xff]
    %v67 = vld [vmem:[%s3 + $0xf0] sm:$0xff]
    %v68 = vld [vmem:[%s3 + $0xf8] sm:$0xff]
    %70 = vst [vmem:[#allocation1] ss:$4 sm:$0xff] %v36
    %v71 = vld.sshfl [vmem:[#allocation1] sm:$0xff pattern:$0x73625140]
    %v72 = vld.sshfl [vmem:[#allocation1 + $0x8] sm:$0xff pattern:$0x73625140]
    %75 = vmatpush.msra.mxu0 %v52
    %76 = vmatpush.msra.mxu0 %v51
    %77 = vmatpush.msra.mxu0 %v50
    %78 = vmatpush.msra.mxu0 %v49
    %79 = vmatpush.msra.mxu0 %v48
    %80 = vmatpush.msra.mxu0 %v47
    %81 = vmatpush.msra.mxu0 %v46
    %82 = vmatpush.msra.mxu0 %v45
    %83 = vmatpush.msra.mxu0 %v44
    %84 = vmatpush.msra.mxu0 %v43
    %85 = vmatpush.msra.mxu0 %v42
    %86 = vmatpush.msra.mxu0 %v41
    %87 = vmatpush.msra.mxu0 %v40
    %88 = vmatpush.msra.mxu0 %v39
    %89 = vmatpush.msra.mxu0 %v38
    %90 = vmatpush.msra.mxu0 %v37
    %91 = vmatmul.f32.gmra.mxu0 %v71
    %v92 = vpop.f32.mrf.mxu0
    %v93 = vadd.f32 0.0, %v92
    %94 = vdwg.mxu0
    %95 = vmatpush.msra.mxu0 %v68
    %96 = vmatpush.msra.mxu0 %v67
    %97 = vmatpush.msra.mxu0 %v66
    %98 = vmatpush.msra.mxu0 %v65
    %99 = vmatpush.msra.mxu0 %v64
    %100 = vmatpush.msra.mxu0 %v63
    %101 = vmatpush.msra.mxu0 %v62
    %102 = vmatpush.msra.mxu0 %v61
    %103 = vmatpush.msra.mxu0 %v60
    %104 = vmatpush.msra.mxu0 %v59
    %105 = vmatpush.msra.mxu0 %v58
    %106 = vmatpush.msra.mxu0 %v57
    %107 = vmatpush.msra.mxu0 %v56
    %108 = vmatpush.msra.mxu0 %v55
    %109 = vmatpush.msra.mxu0 %v54
    %110 = vmatpush.msra.mxu0 %v53
    %111 = vmatmul.f32.gmra.mxu0 %v72
    %v112 = vpop.f32.mrf.mxu0
    %v113 = vadd.f32 %v93, %v112
    %114 = vdwg.mxu0
    %v115 = vrsqrt.pop %v113
    %v116 = vmul.f32 %v115, %v113
    %v117 = vmul.f32 %v116, %v115
    %v118 = vmul.f32 0.5, %v117
    %v119 = vsub.f32 1.5, %v118
    %v120 = vmul.f32 %v115, %v119
    %v121 = vmul.f32 %v113, %v120
    %vm122 = vcmp.eq.f32.partialorder %v113, inf
    %v123 = vsel %vm122, %v113, %v121
    %vm124 = vcmp.eq.f32.partialorder %v113, 0.0
    %v125 = vand.u32 %v113, 2147483648
    %v126 = vsel %vm124, %v125, %v123
    %vm127 = vcmask 58368
    %v128 = vsel %vm127, %v126, 0.0
    %129 = vadd.xlane.f32.xlu0 %v128
    %v130 = vpop.xlane.xlu0 %129
    %v131 = vrcp.pop 8.0
    %v132 = vmul.f32 8.0, %v131
    %v133 = vsub.f32 1.0, %v132
    %v134 = vmul.f32 %v131, %v133
    %v135 = vadd.f32 %v131, %v134
    %vm136 = vweird.f32 %v131
    %v137 = vsel %vm136, %v131, %v135
    %v138 = vmul.f32 %v130, %v137
    %v139 = vsub.f32 %v126, %v138
    %v140 = vmul.f32 %v139, %v139
    %v141 = vsel %vm127, %v140, 0.0
    %142 = vadd.xlane.f32.xlu0 %v141
    %v143 = vpop.xlane.xlu0 %142
    %v144 = vrcp.pop 7.0
    %v145 = vmul.f32 7.0, %v144
    %v146 = vsub.f32 1.0, %v145
    %v147 = vmul.f32 %v144, %v146
    %v148 = vadd.f32 %v144, %v147
    %vm149 = vweird.f32 %v144
    %v150 = vsel %vm149, %v144, %v148
    %v151 = vmul.f32 %v143, %v150
    %v152 = vrsqrt.pop %v151
    %v153 = vmul.f32 %v152, %v151
    %v154 = vmul.f32 %v153, %v152
    %v155 = vmul.f32 0.5, %v154
    %v156 = vsub.f32 1.5, %v155
    %v157 = vmul.f32 %v152, %v156
    %v158 = vmul.f32 %v151, %v157
    %vm159 = vcmp.eq.f32.partialorder %v151, inf
    %v160 = vsel %vm159, %v151, %v158
    %vm161 = vcmp.eq.f32.partialorder %v151, 0.0
    %v162 = vand.u32 %v151, 2147483648
    %v163 = vsel %vm161, %v162, %v160
    %v164 = vadd.f32 %v163, 1e-06
    %v165 = vsub.f32 %v138, %v126
    %v166 = vrcp.pop %v164
    %v167 = vmul.f32 %v164, %v166
    %v168 = vsub.f32 1.0, %v167
    %v169 = vmul.f32 %v166, %v168
    %v170 = vadd.f32 %v166, %v169
    %vm171 = vweird.f32 %v164
    %vm172 = vweird.f32 %v166
    %vm173 = vmor %vm171, %vm172
    %v174 = vsel %vm173, %v166, %v170
    %v175 = vand.u32 2147483647, %v164
    %vm176 = vcmp.eq.f32.partialorder %v175, 8.507059e+37
    %v177 = vand.u32 %v164, 2147483648
    %v178 = vor.u32 1.1754944e-38, %v177
    %v179 = vsel %vm176, %v178, %v174
    %v180 = vmul.f32 %v165, %v179
    %v181 = vsel %vm127, %v180, -inf
    %182 = vmax.xlane.f32.xlu0 %v181
    %v183 = vpop.xlane.xlu0 %182
    %v184 = vsub.f32 %v180, %v183
    %v185 = vmul.f32 %v184, 1.442695
    %v186 = vpow.pop %v185
    %v187 = vsel %vm127, %v186, 0.0
    %188 = vadd.xlane.f32.xlu0 %v187
    %v189 = vpop.xlane.xlu0 %188
    %v190 = vrcp.pop %v189
    %v191 = vmul.f32 %v189, %v190
    %v192 = vsub.f32 1.0, %v191
    %v193 = vmul.f32 %v190, %v192
    %v194 = vadd.f32 %v190, %v193
    %vm195 = vweird.f32 %v189
    %vm196 = vweird.f32 %v190
    %vm197 = vmor %vm195, %vm196
    %v198 = vsel %vm197, %v190, %v194
    %v199 = vand.u32 2147483647, %v189
    %vm200 = vcmp.eq.f32.partialorder %v199, 8.507059e+37
    %v201 = vand.u32 %v189, 2147483648
    %v202 = vor.u32 1.1754944e-38, %v201
    %v203 = vsel %vm200, %v202, %v198
    %v204 = vmul.f32 %v186, %v203
    %v205 = vstv %s31
    %v206 = vmul.f32 %v205, %v204
    %v207 = vadd.f32 %v206, 1.0
    %v208 = vstv %s32
    %v209 = vmul.f32 %v207, %v208
    %v210 = vmul.f32 %v113, %v209
    %v211 = vsel %vm127, %v210, 0.0
    %212 = vadd.xlane.f32.xlu0 %v211
    %v213 = vpop.xlane.xlu0 %212
    %v214 = vrot.slane %v213, 4
    %v215 = vadd.f32 %v213, %v214
    %v216 = vrot.slane %v215, 2
    %v217 = vadd.f32 %v215, %v216
    %v218 = vrot.slane %v217, 1
    %v219 = vadd.f32 %v217, %v218
    %s220 = vtos %v219
    %s221 = scalar_lea.smem [#allocation5], 0
    %222 = sst [smem:[%s221]] %s220
    // Predicated region
    $region22: #{tpu_custom_call.1} parent=1 // pred_check
      _
    $region23: #{tpu_custom_call.1} parent=1 // pred_check_branch
      %224 = sbr.rel (0) target = $region25
    $region24: #{tpu_custom_call.1} parent=1 // pred_region
      %226 = vsyncadd [#allocation3], 0
      %s228 = sshll.u32 %s4, 4
      %s229 = int_to_ptr.hbm [resolvable:$true] %s228
      %231 = dma.smem_to_hbm [#allocation5], 16, %s229, [#allocation3]
    $region25: #{tpu_custom_call.1} parent=1 // pred_fallthru
      _
    // Predicated region
    $region26: #{tpu_custom_call.1} parent=1 // pred_check
      _
    $region27: #{tpu_custom_call.1} parent=1 // pred_check_branch
      %233 = sbr.rel (0) target = $region29
    $region28: #{tpu_custom_call.1} parent=1 // pred_region
      %235 = dma.done [#allocation3], 16
    $region29: #{tpu_custom_call.1} parent=1 // pred_fallthru
      _
    %236 = sfence
    %237 = vsyncpa [#allocation3], 1
    %238 = vsyncpa [#allocation4], 1

</llo_original>
